<compile_context>
chip_gen: v7x
topology: tpu7x:2x2x1
jax: 0.10.0
libtpu: 0.0.40
codegen_flags: <defaults>
</compile_context>

<pallas_src>
import functools

import jax
import jax.numpy as jnp
from jax import lax
from jax.experimental import pallas as pl
from jax.experimental.pallas import tpu as pltpu


def _round_up(x, m):
    return (x + m - 1) // m * m


# ----------------------------- Pallas kernel ------------------------------- #
def _matmul_kernel(p_ref, w_ref, o_ref):
    # Single-shot MXU matmul per (M-tile, Cout-tile): full-K bf16 operands,
    # f32 result written straight to the lane-dense output block.
    o_ref[...] = jnp.dot(p_ref[...], w_ref[...],
                         preferred_element_type=jnp.float32)


# --------------------------- dual fake-quantize ----------------------------- #
def _dual_quantize(weight, bitwidth):
    """STEQuantizeDual forward, folded into one effective weight (pos_q - neg_q)."""
    w = weight.astype(jnp.float32)
    scale = (bitwidth - 1) / 2.0

    pos = jnp.clip(w, 0.0, 1.0)
    neg = jnp.clip(w, -1.0, 0.0)
    pos_max, pos_min = jnp.max(pos), jnp.min(pos)
    neg_max, neg_min = jnp.max(neg), jnp.min(neg)

    pos_n = jnp.where(pos_max != 0.0, (pos - pos_min) / (pos_max - pos_min), pos)
    pos_q = jnp.round(pos_n * scale) / scale
    neg_n = jnp.where(neg_min != 0.0,
                      1.0 + (neg - neg_max) / (neg_min - neg_max), neg)
    neg_q = jnp.round(neg_n * scale) / scale - 1.0

    # conv(x, pos_q) + conv(x, -neg_q) == conv(x, pos_q - neg_q)
    return pos_q - neg_q


# ------------------------------- wrapper ----------------------------------- #
def diff_quant_conv2d(x_nchw, weight, bitwidth, *, tm_max=512, tn_max=512,
                      vmem_budget_bytes=24 * 1024 * 1024):
    """Forward of DifferentialQuantizedLayer wrapping nn.Conv2d (no bias,
    stride=1, padding=0). x: (N, Cin, H, W), weight: (Cout, Cin, KH, KW)."""
    N, Cin, H, W = x_nchw.shape
    Cout, Cin_w, KH, KW = weight.shape
    assert Cin == Cin_w
    OH, OW = H - KH + 1, W - KW + 1
    M = N * OH * OW
    K = Cin * KH * KW

    dn = ("NCHW", "OIHW", "NHWC")  # channels-last patch output -> no transpose copy

    # im2col: cast to bf16 FIRST (exact data movement), single fused XLA op.
    x_bf16 = x_nchw.astype(jnp.bfloat16)
    patches = lax.conv_general_dilated_patches(
        x_bf16, (KH, KW), (1, 1), "VALID", dimension_numbers=dn)   # (N, OH, OW, K)
    P = patches.reshape(M, K)                                       # bf16, no M/K padding

    # Quantized weight: flatten with the SAME patches primitive so the K ordering
    # matches P by construction; transpose to (K, Cout); pad Cout to a lane-dense
    # multiple of 128; bf16 for MXU.
    # Note: the fake-quant levels (multiples of 2/(b-1)) are slightly perturbed by the
    # bf16 cast; keep Wt in f32 if bit-exact levels are required.
    w_eff = _dual_quantize(weight, bitwidth)                        # (Cout, Cin, KH, KW) f32
    w_flat = lax.conv_general_dilated_patches(
        w_eff, (KH, KW), (1, 1), "VALID", dimension_numbers=dn).reshape(Cout, K)

    tn = min(tn_max, _round_up(Cout, 128))
    Cout_pad = _round_up(Cout, tn)
    Wt = jnp.pad(w_flat.T, ((0, 0), (0, Cout_pad - Cout))).astype(jnp.bfloat16)  # (K, Cout_pad)

    # Tile selection: full K per block (weight panel VMEM-resident, no K grid axis),
    # tm a 16-multiple (bf16 sublane packing).  Shrink tm if the double-buffered
    # blocks would blow the VMEM budget (scoped default on v5e is only 16 MiB, so we
    # also set vmem_limit_bytes explicitly below).
    tm = min(tm_max, _round_up(M, 16))

    def _vmem_bytes(tm_):
        return 2 * (tm_ * K * 2 + K * tn * 2 + tm_ * tn * 4)   # double-buffered blocks

    while tm > 64 and _vmem_bytes(tm) > vmem_budget_bytes:
        tm = max(64, _round_up(tm // 2, 16))

    grid_m, grid_n = pl.cdiv(M, tm), Cout_pad // tn
    # v7x has two TensorCores: keep at least 2 "parallel" tiles so both get work.
    if grid_m * grid_n < 2 and M > 32:
        tm = _round_up(pl.cdiv(M, 2), 16)
        grid_m = pl.cdiv(M, tm)

    out_flat = pl.pallas_call(
        _matmul_kernel,
        out_shape=jax.ShapeDtypeStruct((M, Cout_pad), jnp.float32),
        grid=(grid_m, grid_n),
        in_specs=[
            pl.BlockSpec((tm, K), lambda i, j: (i, 0)),   # activation panel
            pl.BlockSpec((K, tn), lambda i, j: (0, j)),   # quantized weight panel
        ],
        out_specs=pl.BlockSpec((tm, tn), lambda i, j: (i, j)),
        compiler_params=pltpu.CompilerParams(
            dimension_semantics=("parallel", "parallel"),
            vmem_limit_bytes=32 * 1024 * 1024),
    )(P, Wt)

    # (M, Cout) -> (N, Cout, OH, OW); NCHW kept to match the PyTorch module output.
    out = out_flat[:, :Cout].reshape(N, OH, OW, Cout)
    return jnp.transpose(out, (0, 3, 1, 2))


# ------------------------------ reference ---------------------------------- #
def _reference(x_nchw, weight, bitwidth):
    """Pure-JAX replication of the PyTorch module forward (f32)."""
    w = weight.astype(jnp.float32)
    scale = (bitwidth - 1) / 2.0

    pos = jnp.clip(w, 0.0, 1.0)
    neg = jnp.clip(w, -1.0, 0.0)
    pos_max, pos_min = jnp.max(pos), jnp.min(pos)
    neg_max, neg_min = jnp.max(neg), jnp.min(neg)

    pos_n = jnp.where(pos_max != 0.0, (pos - pos_min) / (pos_max - pos_min), pos)
    pos_q = jnp.round(pos_n * scale) / scale
    neg_n = jnp.where(neg_min != 0.0,
                      1.0 + (neg - neg_max) / (neg_min - neg_max), neg)
    neg_q = jnp.round(neg_n * scale) / scale - 1.0

    def conv(w_):
        return lax.conv_general_dilated(
            x_nchw.astype(jnp.float32), w_, (1, 1), "VALID",
            dimension_numbers=("NCHW", "OIHW", "NCHW"))

    return conv(pos_q) + conv(-neg_q)


if __name__ == "__main__":
    key = jax.random.PRNGKey(0)
    k_x, k_w = jax.random.split(key)

    # DifferentialQuantizedLayer(nn.Conv2d(4, 8, kernel_size=3, bias=False), bitwidth=4)
    N, Cin, H, W = 2, 4, 16, 16
    Cout, KH, KW = 8, 3, 3
    bitwidth = 4

    x = jax.random.normal(k_x, (N, Cin, H, W), dtype=jnp.float32)
    bound = 1.0 / (Cin * KH * KW) ** 0.5   # ~ PyTorch kaiming-uniform range
    weight = jax.random.uniform(
        k_w, (Cout, Cin, KH, KW), minval=-bound, maxval=bound, dtype=jnp.float32)

    fwd = jax.jit(functools.partial(diff_quant_conv2d, bitwidth=bitwidth))
    y = fwd(x, weight)
    y = jax.block_until_ready(y)

    y_ref = _reference(x, weight, bitwidth)
    assert y.shape == (N, Cout, H - KH + 1, W - KW + 1)
    # bf16 MXU operands (f32 accumulation) -> tolerance loosened vs f32 reference.
    err = float(jnp.max(jnp.abs(y - y_ref)))
    assert jnp.allclose(y, y_ref, atol=1e-1, rtol=5e-2), f"mismatch vs reference: {err}"

    print("KERNEL_OK")
</pallas_src>

<mosaic_0001>
module attributes {stable_mosaic.version = 11 : i64} {
  func.func @_matmul_kernel(%arg0: i32, %arg1: i32, %arg2: memref<208x36xbf16, #tpu.memory_space<vmem>>, %arg3: memref<36x128xbf16, #tpu.memory_space<vmem>>, %arg4: memref<208x128xf32, #tpu.memory_space<vmem>>) attributes {dimension_semantics = [#tpu.dimension_semantics<parallel>, #tpu.dimension_semantics<parallel>], iteration_bounds = array<i64: 2, 1>, scalar_prefetch = 0 : i64, scratch_operands = 0 : i64, tpu.core_type = #tpu.core_type<tc>, window_params = [{transform_indices = @transform_0, window_bounds = array<i64: 208, 36>}, {transform_indices = @transform_1, window_bounds = array<i64: 36, 128>}, {transform_indices = @transform_2, window_bounds = array<i64: 208, 128>}]} {
    %c0 = arith.constant 0 : index
    %c0_0 = arith.constant 0 : index
    %0 = vector.load %arg2[%c0, %c0_0] : memref<208x36xbf16, #tpu.memory_space<vmem>>, vector<208x36xbf16>
    %c0_1 = arith.constant 0 : index
    %c0_2 = arith.constant 0 : index
    %1 = vector.load %arg3[%c0_1, %c0_2] : memref<36x128xbf16, #tpu.memory_space<vmem>>, vector<36x128xbf16>
    %cst = arith.constant dense<0.000000e+00> : vector<208x128xf32>
    %2 = tpu.matmul %0, %1, %cst {dimension_numbers = #tpu.dot_dimension_numbers<[1], [0], [0], [1], [0, 0, 1, 1], [], []>} : vector<208x36xbf16>, vector<36x128xbf16>, vector<208x128xf32> -> vector<208x128xf32>
    %c0_3 = arith.constant 0 : index
    %c0_4 = arith.constant 0 : index
    %3 = vector.load %arg4[%c0_3, %c0_4] : memref<208x128xf32, #tpu.memory_space<vmem>>, vector<208x128xf32>
    tpu.vector_store %arg4[%c0_3, %c0_4], %2 {strides = array<i32>} : memref<208x128xf32, #tpu.memory_space<vmem>>, vector<208x128xf32>,
    return
  }
  func.func @transform_0(%arg0: i32, %arg1: i32) -> (i32, i32) {
    %c0_i32 = arith.constant 0 : i32
    %c0_i32_0 = arith.constant 0 : i32
    return %arg0, %c0_i32 : i32, i32
  }
  func.func @transform_1(%arg0: i32, %arg1: i32) -> (i32, i32) {
    %c0_i32 = arith.constant 0 : i32
    %c0_i32_0 = arith.constant 0 : i32
    return %c0_i32, %arg1 : i32, i32
  }
  func.func @transform_2(%arg0: i32, %arg1: i32) -> (i32, i32) {
    %c0_i32 = arith.constant 0 : i32
    return %arg0, %arg1 : i32, i32
  }
}

</mosaic_0001>

<llo_original>
// kernel: diff_quant_conv2d.1
$region0: #{diff_quant_conv2d.1}
  #allocation0 [shape = 'u32[]', space=smem, size = 0x4, offset = 0x4, fixed_abs, tag = 'smem constant byte address 0x4 - core index']
  #allocation1 [shape = 'u32[144,128]{1,0:T(1,128)}', space=vmem, size = 0x12000, scoped, tag = 'internal scratch']
  %s0 = inlined_call_operand.vmem [shape: bf16[392,36], index: 0, kind: input, shape index: {}]
  %s1 = inlined_call_operand.vmem [shape: bf16[36,128], index: 1, kind: input, shape index: {}]
  %s2 = inlined_call_operand.vmem [shape: f32[392,128], index: 2, kind: output, shape index: {}]
  %s3 = sld [smem:[#allocation0]]
  $region89: #{diff_quant_conv2d.1} parent=0
    _
  %s5 = ssub.s32 1, %s3
  %s6 = scalar_select 0, %s5, %s3
  $region1: #{diff_quant_conv2d.1} parent=0
    #allocation2 [shape = 'u8[212992]{0}', space=vmem, size = 0x34000, scoped, tag = 'output window, operand 0']
    loop: start=0, step=1, limit=4
    $region2: #{diff_quant_conv2d.1} parent=1 // loop_pre_header
      _
    $region3: #{diff_quant_conv2d.1} parent=1 // loop_header
      %s8 = sphi 0, %s12
      %p9 = scmp.ge.s32.totalorder %s8, 4
      %s15 = sphi 0, %s27
      %s16 = sphi 0, %s23
      %s17 = sphi 0, %s15
      %s18 = sphi 0, %s16
      %s19 = sphi 0, %s17
      %s20 = sphi 0, %s18
      %s30 = sphi 0, %s32
      %s33 = sphi 0, %s30
      %s34 = sphi 0, %s33
      %s50 = sphi 0, %s34
      %s56 = sphi 0, %s58
      %s59 = sphi 0, %s56
      %s60 = sphi 0, %s59
      %s76 = sphi 0, %s60
      %s84 = sphi 0, %s86
      %s87 = sphi 0, %s84
      %s88 = sphi 0, %s87
      %s104 = sphi 0, %s88
    $region4: #{diff_quant_conv2d.1} parent=1 // loop_header_branch
      %11 = sbr.rel (%p9) target = $region8
    $region5: #{diff_quant_conv2d.1} parent=1 // loop_body
      %s13 = ssub.s32 %s8, 1
      %s14 = ssub.s32 %s8, 2
      %s21 = sadd.s32 1, %s16
      %p22 = scmp.ge.s32.totalorder %s21, 1
      %s23 = scalar_select %p22, 0, %s21
      %s24 = sadd.s32 1, %s15
      %s25 = scalar_select %p22, %s24, %s15
      %p26 = scmp.ge.s32.totalorder %s25, 2
      %s27 = scalar_select %p26, 0, %s25
      %s28 = ssub.s32 %s15, %s27
      %p29 = scmp.eq.s32.totalorder %s28, 0
      %s31 = sadd.s32 %s30, 1
      %s32 = scalar_select %p29, %s30, %s31
      %p35 = pneg %p29
      %p36 = scmp.eq.s32.totalorder %s8, 1
      %p37 = por %p35, %p36
      %p38 = scmp.ne.s32.totalorder %s30, %s33
      %p39 = scmp.eq.s32.totalorder %s8, 0
      %p40 = por %p38, %p39
      %p41 = scmp.ne.s32.totalorder %s30, %s33
      %p42 = scmp.eq.s32.totalorder %s13, 1
      %p43 = por %p41, %p42
      %p44 = scmp.ne.s32.totalorder %s33, %s34
      %p45 = scmp.eq.s32.totalorder %s13, 0
      %p46 = por %p44, %p45
      %p47 = scmp.ne.s32.totalorder %s33, %s34
      %p48 = scmp.eq.s32.totalorder %s14, 1
      %p49 = por %p47, %p48
      %p51 = scmp.ne.s32.totalorder %s34, %s50
      %p52 = scmp.eq.s32.totalorder %s14, 0
      %p53 = por %p51, %p52
      %s54 = ssub.s32 %s16, %s23
      %p55 = scmp.eq.s32.totalorder %s54, 0
      %s57 = sadd.s32 %s56, 1
      %s58 = scalar_select %p55, %s56, %s57
      %p61 = pneg %p55
      %p62 = scmp.eq.s32.totalorder %s8, 1
      %p63 = por %p61, %p62
      %p64 = scmp.ne.s32.totalorder %s56, %s59
      %p65 = scmp.eq.s32.totalorder %s8, 0
      %p66 = por %p64, %p65
      %p67 = scmp.ne.s32.totalorder %s56, %s59
      %p68 = scmp.eq.s32.totalorder %s13, 1
      %p69 = por %p67, %p68
      %p70 = scmp.ne.s32.totalorder %s59, %s60
      %p71 = scmp.eq.s32.totalorder %s13, 0
      %p72 = por %p70, %p71
      %p73 = scmp.ne.s32.totalorder %s59, %s60
      %p74 = scmp.eq.s32.totalorder %s14, 1
      %p75 = por %p73, %p74
      %p77 = scmp.ne.s32.totalorder %s60, %s76
      %p78 = scmp.eq.s32.totalorder %s14, 0
      %p79 = por %p77, %p78
      %s80 = ssub.s32 %s15, %s27
      %s81 = ssub.s32 %s16, %s23
      %s82 = sor.u32 %s80, %s81
      %p83 = scmp.eq.s32.totalorder %s82, 0
      %s85 = sadd.s32 %s84, 1
      %s86 = scalar_select %p83, %s84, %s85
      %p89 = pneg %p83
      %p90 = scmp.eq.s32.totalorder %s8, 1
      %p91 = por %p89, %p90
      %p92 = scmp.ne.s32.totalorder %s84, %s87
      %p93 = scmp.eq.s32.totalorder %s8, 0
      %p94 = por %p92, %p93
      %p95 = scmp.ne.s32.totalorder %s84, %s87
      %p96 = scmp.eq.s32.totalorder %s13, 1
      %p97 = por %p95, %p96
      %p98 = scmp.ne.s32.totalorder %s87, %s88
      %p99 = scmp.eq.s32.totalorder %s13, 0
      %p100 = por %p98, %p99
      %p101 = scmp.ne.s32.totalorder %s87, %s88
      %p102 = scmp.eq.s32.totalorder %s14, 1
      %p103 = por %p101, %p102
      %p105 = scmp.ne.s32.totalorder %s88, %s104
      %p106 = scmp.eq.s32.totalorder %s14, 0
      %p107 = por %p105, %p106
      %p108 = scmp.le.s32.totalorder 1, %s8
      %p109 = scmp.lt.s32.totalorder %s8, 3
      %p110 = pnand %p108, %p109
      %p111 = pneg %p110
      // Predicated region
      $region9: #{diff_quant_conv2d.1} parent=5 // pred_check
        _
      $region10: #{diff_quant_conv2d.1} parent=5 // pred_check_branch
        %113 = sbr.rel (%p110) target = $region12
      $region11: #{diff_quant_conv2d.1} parent=5 // pred_region
        %s114 = ssub.s32 %s8, 1
        // Predicated region
        $region13: #{diff_quant_conv2d.1} parent=11 // pred_check
          %p115 = pneg %p72
        $region14: #{diff_quant_conv2d.1} parent=11 // pred_check_branch
          %117 = sbr.rel (%p115) target = $region16
        $region15: #{diff_quant_conv2d.1} parent=11 // pred_region
          %p118 = scmp.lt.s32.totalorder %s18, 0
          %s119 = scalar_select %p118, %s18, 0
          %s120 = smul.addr %s119, 4
          %s121 = scalar_lea.vmem %s1, %s120
        $region16: #{diff_quant_conv2d.1} parent=11 // pred_fallthru
          _
      $region12: #{diff_quant_conv2d.1} parent=5 // pred_fallthru
        _
      %p122 = scmp.lt.s32.totalorder %s8, 2
      // Predicated region
      $region17: #{diff_quant_conv2d.1} parent=5 // pred_check
        %p123 = pneg %p122
      $region18: #{diff_quant_conv2d.1} parent=5 // pred_check_branch
        %125 = sbr.rel (%p123) target = $region20
      $region19: #{diff_quant_conv2d.1} parent=5 // pred_region
        // Predicated region
        $region21: #{diff_quant_conv2d.1} parent=19 // pred_check
          %p126 = pneg %p40
        $region22: #{diff_quant_conv2d.1} parent=19 // pred_check_branch
          %128 = sbr.rel (%p126) target = $region24
        $region23: #{diff_quant_conv2d.1} parent=19 // pred_region
          %s129 = smul.u32 26, %s15
          %s130 = ssub.s32 49, %s129
          %p131 = scmp.lt.s32.totalorder %s130, 26
          %s132 = scalar_select %p131, %s130, 26
          %s133 = smul.u32 64, %s132
          %p134 = scmp.lt.s32.totalorder %s129, 48
          %s135 = scalar_select %p134, %s129, 48
          %s136 = smul.addr %s135, 4
          %s137 = scalar_lea.vmem %s0, %s136
          %s138 = smul.u32 26, %s15
          %s139 = ssub.s32 49, %s138
          %p140 = scmp.lt.s32.totalorder %s139, 26
          %s141 = scalar_select %p140, %s139, 26
          %s142 = smul.u32 64, %s141
        $region24: #{diff_quant_conv2d.1} parent=19 // pred_fallthru
          _
      $region20: #{diff_quant_conv2d.1} parent=5 // pred_fallthru
        _
      %p143 = scmp.le.s32.totalorder 1, %s8
      %p144 = scmp.lt.s32.totalorder %s8, 3
      %p145 = pnand %p143, %p144
      %p146 = pneg %p145
      // Predicated region
      $region25: #{diff_quant_conv2d.1} parent=5 // pred_check
        _
      $region26: #{diff_quant_conv2d.1} parent=5 // pred_check_branch
        %148 = sbr.rel (%p145) target = $region28
      $region27: #{diff_quant_conv2d.1} parent=5 // pred_region
        %s149 = ssub.s32 %s8, 1
        %s150 = smul.u32 26, %s17
        %s151 = ssub.s32 49, %s150
        %p152 = scmp.lt.s32.totalorder %s151, 26
        %s153 = scalar_select %p152, %s151, 26
        %s154 = smul.u32 64, %s153
        %p155 = scmp.lt.s32.totalorder %s150, 48
        %s156 = scalar_select %p155, %s150, 48
        %s157 = smul.addr %s156, 4
        %s158 = scalar_lea.vmem %s0, %s157
        %p159 = pneg %p46
        %p160 = pneg %p43
        %p161 = scmp.lt.s32.totalorder %s18, 0
        %s162 = scalar_select %p161, %s18, 0
        %s163 = smul.addr %s162, 4
        %s164 = scalar_lea.vmem %s1, %s163
        %p165 = pneg %p72
        %p166 = pneg %p69
        %p167 = pneg %p100
        %p168 = pneg %p97
        %s169 = sand.u32 %s87, 1
        %s170 = sand.u32 %s87, 1
        %s171 = smul.addr %s170, 208
        %s172 = scalar_lea.vmem [#allocation2], %s171
        %s173 = smul.u32 26, %s17
        %s174 = ssub.s32 49, %s173
        %p175 = scmp.lt.s32.totalorder %s174, 26
        %s176 = scalar_select %p175, %s174, 26
        %s177 = smul.u32 64, %s176
        %p178 = scmp.lt.s32.totalorder %s173, 48
        %s179 = scalar_select %p178, %s173, 48
        %s180 = smul.addr %s179, 4
        %s181 = scalar_lea.vmem %s0, %s180
        %s182 = smul.u32 26, %s17
        %s183 = ssub.s32 49, %s182
        %p184 = scmp.lt.s32.totalorder %s183, 26
        %s185 = scalar_select %p184, %s183, 26
        %s186 = smul.u32 64, %s185
        %p187 = scmp.lt.s32.totalorder %s18, 0
        %s188 = scalar_select %p187, %s18, 0
        %s189 = smul.addr %s188, 4
        %s190 = scalar_lea.vmem %s1, %s189
        %s191 = smul.u32 26, %s17
        %s192 = ssub.s32 49, %s191
        %p193 = scmp.lt.s32.totalorder %s192, 26
        %s194 = scalar_select %p193, %s192, 26
        %s195 = smul.u32 128, %s194
        %v197 = vld [vmem:[%s181] sm:$0xf]
        %v198 = vld [vmem:[%s181 + $0x4] sm:$0xf]
        %v199 = vld [vmem:[%s181 + $0x8] sm:$0xf]
        %v200 = vld [vmem:[%s181 + $0xc] sm:$0xf]
        %v201 = vld [vmem:[%s181 + $0x10] sm:$0xf]
        %v202 = vld [vmem:[%s181 + $0x14] sm:$0xf]
        %v203 = vld [vmem:[%s181 + $0x18] sm:$0xf]
        %v204 = vld [vmem:[%s181 + $0x1c] sm:$0xf]
        %v205 = vld [vmem:[%s181 + $0x20] sm:$0xf]
        %v206 = vld [vmem:[%s181 + $0x24] sm:$0xf]
        %v207 = vld [vmem:[%s181 + $0x28] sm:$0xf]
        %v208 = vld [vmem:[%s181 + $0x2c] sm:$0xf]
        %v209 = vld [vmem:[%s181 + $0x30] sm:$0xf]
        %v210 = vld [vmem:[%s181 + $0x34] sm:$0xf]
        %v211 = vld [vmem:[%s181 + $0x38] sm:$0xf]
        %v212 = vld [vmem:[%s181 + $0x3c] sm:$0xf]
        %v213 = vld [vmem:[%s181 + $0x40] sm:$0xf]
        %v214 = vld [vmem:[%s181 + $0x44] sm:$0xf]
        %v215 = vld [vmem:[%s181 + $0x48] sm:$0xf]
        %v216 = vld [vmem:[%s181 + $0x4c] sm:$0xf]
        %v217 = vld [vmem:[%s181 + $0x50] sm:$0xf]
        %v218 = vld [vmem:[%s181 + $0x54] sm:$0xf]
        %v219 = vld [vmem:[%s181 + $0x58] sm:$0xf]
        %v220 = vld [vmem:[%s181 + $0x5c] sm:$0xf]
        %v221 = vld [vmem:[%s181 + $0x60] sm:$0xf]
        %v222 = vld [vmem:[%s181 + $0x64] sm:$0xf]
        %v223 = vld [vmem:[%s190] sm:$0xf]
        %v224 = vld [vmem:[%s190 + $0x4] sm:$0xf]
        %v225 = vld [vmem:[%s190 + $0x8] sm:$0xf]
        %v226 = vld [vmem:[%s190 + $0xc] sm:$0xf]
        %v227 = vld [vmem:[%s190 + $0x10] sm:$0x3]
        %v254 = vunpack.c.l.b16 %v197
        %v255 = vunpack.c.l.b16 %v198
        %v256 = vunpack.c.l.b16 %v199
        %v257 = vunpack.c.l.b16 %v200
        %v258 = vunpack.c.l.b16 %v201
        %v259 = vunpack.c.l.b16 %v202
        %v260 = vunpack.c.l.b16 %v203
        %v261 = vunpack.c.l.b16 %v204
        %v262 = vunpack.c.l.b16 %v205
        %v263 = vunpack.c.l.b16 %v206
        %v264 = vunpack.c.l.b16 %v207
        %v265 = vunpack.c.l.b16 %v208
        %v266 = vunpack.c.l.b16 %v209
        %v267 = vunpack.c.l.b16 %v210
        %v268 = vunpack.c.l.b16 %v211
        %v269 = vunpack.c.l.b16 %v212
        %v270 = vunpack.c.l.b16 %v213
        %v271 = vunpack.c.l.b16 %v214
        %v272 = vunpack.c.l.b16 %v215
        %v273 = vunpack.c.l.b16 %v216
        %v274 = vunpack.c.l.b16 %v217
        %v275 = vunpack.c.l.b16 %v218
        %v276 = vunpack.c.l.b16 %v219
        %v277 = vunpack.c.l.b16 %v220
        %v278 = vunpack.c.l.b16 %v221
        %v279 = vunpack.c.l.b16 %v222
        %v280 = vpack.c.b16 %v255, %v254
        %v281 = vpack.c.b16 %v257, %v256
        %v282 = vpack.c.b16 %v259, %v258
        %v283 = vpack.c.b16 %v261, %v260
        %v284 = vpack.c.b16 %v263, %v262
        %v285 = vpack.c.b16 %v265, %v264
        %v286 = vpack.c.b16 %v267, %v266
        %v287 = vpack.c.b16 %v269, %v268
        %v288 = vpack.c.b16 %v271, %v270
        %v289 = vpack.c.b16 %v273, %v272
        %v290 = vpack.c.b16 %v275, %v274
        %v291 = vpack.c.b16 %v277, %v276
        %v292 = vpack.c.b16 %v279, %v278
        %v298 = vunpack.c.l.b16 %v223
        %v299 = vunpack.c.l.b16 %v224
        %v300 = vunpack.c.l.b16 %v225
        %v301 = vunpack.c.l.b16 %v226
        %v302 = vunpack.c.l.b16 %v227
        %v303 = vpack.c.b16 %v299, %v298
        %v304 = vpack.c.b16 %v301, %v300
        %v305 = vpack.c.b16 %v302, %v302
        %vm308 = vcmask 293888
        %v310 = vsel %vm308, %v280, 0
        %v313 = vsel %vm308, %v281, 0
        %v316 = vsel %vm308, %v282, 0
        %v319 = vsel %vm308, %v283, 0
        %v322 = vsel %vm308, %v284, 0
        %v325 = vsel %vm308, %v285, 0
        %v328 = vsel %vm308, %v286, 0
        %v331 = vsel %vm308, %v287, 0
        %v334 = vsel %vm308, %v288, 0
        %v337 = vsel %vm308, %v289, 0
        %v340 = vsel %vm308, %v290, 0
        %v343 = vsel %vm308, %v291, 0
        %v346 = vsel %vm308, %v292, 0
        %vm348 = vcmask 1041408
        %v350 = vsel %vm348, %v305, 0
        %352 = vmatprep.subr.bf16.mxu0 0
        %353 = vmatpush1.bf16.msra.mxu0 %v303
        %354 = vmatprep.subr.bf16.mxu0 0
        %355 = vmatpush1.bf16.msra.mxu0 %v304
        %356 = vmatprep.subr.bf16.mxu0 0
        %357 = vmatpush1.bf16.msra.mxu0 %v350
        %358 = vmatprep.subr.bf16.mxu0 0
        %359 = vmatpush1.bf16.msra.mxu0 0
        %360 = vmatprep.subr.bf16.mxu0 0
        %361 = vmatpush1.bf16.msra.mxu0 0
        %362 = vmatprep.subr.bf16.mxu0 0
        %363 = vmatpush1.bf16.msra.mxu0 0
        %364 = vmatprep.subr.bf16.mxu0 0
        %365 = vmatpush1.bf16.msra.mxu0 0
        %366 = vmatprep.subr.bf16.mxu0 0
        %367 = vmatpush1.bf16.msra.mxu0 0
        %368 = vmatprep.subr.bf16.mxu0 0
        %369 = vmatpush1.bf16.msra.mxu0 0
        %370 = vmatprep.subr.bf16.mxu0 0
        %371 = vmatpush1.bf16.msra.mxu0 0
        %372 = vmatprep.subr.bf16.mxu0 0
        %373 = vmatpush1.bf16.msra.mxu0 0
        %374 = vmatprep.subr.bf16.mxu0 0
        %375 = vmatpush1.bf16.msra.mxu0 0
        %376 = vmatprep.subr.bf16.mxu0 0
        %377 = vmatpush1.bf16.msra.mxu0 0
        %378 = vmatprep.subr.bf16.mxu0 0
        %379 = vmatpush1.bf16.msra.mxu0 0
        %380 = vmatprep.subr.bf16.mxu0 0
        %381 = vmatpush1.bf16.msra.mxu0 0
        %382 = vmatprep.subr.bf16.mxu0 0
        %383 = vmatpush1.bf16.msra.mxu0 0
        %384 = vmatprep.mubr.bf16.mxu0 0
        %385 = vmatmul.mubr.bf16.gmra.mrb[0].mxu0 %v310
        %v386 = vpop.f32.mrb[0].mxu0
        %v387 = vadd.f32 0.0, %v386
        %v388 = vpop.f32.mrb[0].mxu0
        %v389 = vpop.f32.mrb[0].mxu0
        %v390 = vadd.f32 0.0, %v389
        %v391 = vpop.f32.mrb[0].mxu0
        %392 = vmatprep.mubr.bf16.mxu0 0
        %393 = vmatmul.mubr.bf16.gmra.mrb[0].mxu0 %v313
        %v394 = vpop.f32.mrb[0].mxu0
        %v395 = vadd.f32 0.0, %v394
        %v396 = vpop.f32.mrb[0].mxu0
        %v397 = vpop.f32.mrb[0].mxu0
        %v398 = vadd.f32 0.0, %v397
        %v399 = vpop.f32.mrb[0].mxu0
        %400 = vmatprep.mubr.bf16.mxu0 0
        %401 = vmatmul.mubr.bf16.gmra.mrb[0].mxu0 %v316
        %v402 = vpop.f32.mrb[0].mxu0
        %v403 = vadd.f32 0.0, %v402
        %v404 = vpop.f32.mrb[0].mxu0
        %v405 = vpop.f32.mrb[0].mxu0
        %v406 = vadd.f32 0.0, %v405
        %v407 = vpop.f32.mrb[0].mxu0
        %408 = vmatprep.mubr.bf16.mxu0 0
        %409 = vmatmul.mubr.bf16.gmra.mrb[0].mxu0 %v319
        %v410 = vpop.f32.mrb[0].mxu0
        %v411 = vadd.f32 0.0, %v410
        %v412 = vpop.f32.mrb[0].mxu0
        %v413 = vpop.f32.mrb[0].mxu0
        %v414 = vadd.f32 0.0, %v413
        %v415 = vpop.f32.mrb[0].mxu0
        %416 = vmatprep.mubr.bf16.mxu0 0
        %417 = vmatmul.mubr.bf16.gmra.mrb[0].mxu0 %v322
        %v418 = vpop.f32.mrb[0].mxu0
        %v419 = vadd.f32 0.0, %v418
        %v420 = vpop.f32.mrb[0].mxu0
        %v421 = vpop.f32.mrb[0].mxu0
        %v422 = vadd.f32 0.0, %v421
        %v423 = vpop.f32.mrb[0].mxu0
        %424 = vmatprep.mubr.bf16.mxu0 0
        %425 = vmatmul.mubr.bf16.gmra.mrb[0].mxu0 %v325
        %v426 = vpop.f32.mrb[0].mxu0
        %v427 = vadd.f32 0.0, %v426
        %v428 = vpop.f32.mrb[0].mxu0
        %v429 = vpop.f32.mrb[0].mxu0
        %v430 = vadd.f32 0.0, %v429
        %v431 = vpop.f32.mrb[0].mxu0
        %432 = vmatprep.mubr.bf16.mxu0 0
        %433 = vmatmul.mubr.bf16.gmra.mrb[0].mxu0 %v328
        %v434 = vpop.f32.mrb[0].mxu0
        %v435 = vadd.f32 0.0, %v434
        %v436 = vpop.f32.mrb[0].mxu0
        %v437 = vpop.f32.mrb[0].mxu0
        %v438 = vadd.f32 0.0, %v437
        %v439 = vpop.f32.mrb[0].mxu0
        %440 = vmatprep.mubr.bf16.mxu0 0
        %441 = vmatmul.mubr.bf16.gmra.mrb[0].mxu0 %v331
        %v442 = vpop.f32.mrb[0].mxu0
        %v443 = vadd.f32 0.0, %v442
        %v444 = vpop.f32.mrb[0].mxu0
        %v445 = vpop.f32.mrb[0].mxu0
        %v446 = vadd.f32 0.0, %v445
        %v447 = vpop.f32.mrb[0].mxu0
        %448 = vmatprep.mubr.bf16.mxu0 0
        %449 = vmatmul.mubr.bf16.gmra.mrb[0].mxu0 %v334
        %v450 = vpop.f32.mrb[0].mxu0
        %v451 = vadd.f32 0.0, %v450
        %v452 = vpop.f32.mrb[0].mxu0
        %v453 = vpop.f32.mrb[0].mxu0
        %v454 = vadd.f32 0.0, %v453
        %v455 = vpop.f32.mrb[0].mxu0
        %456 = vmatprep.mubr.bf16.mxu0 0
        %457 = vmatmul.mubr.bf16.gmra.mrb[0].mxu0 %v337
        %v458 = vpop.f32.mrb[0].mxu0
        %v459 = vadd.f32 0.0, %v458
        %v460 = vpop.f32.mrb[0].mxu0
        %v461 = vpop.f32.mrb[0].mxu0
        %v462 = vadd.f32 0.0, %v461
        %v463 = vpop.f32.mrb[0].mxu0
        %464 = vmatprep.mubr.bf16.mxu0 0
        %465 = vmatmul.mubr.bf16.gmra.mrb[0].mxu0 %v340
        %v466 = vpop.f32.mrb[0].mxu0
        %v467 = vadd.f32 0.0, %v466
        %v468 = vpop.f32.mrb[0].mxu0
        %v469 = vpop.f32.mrb[0].mxu0
        %v470 = vadd.f32 0.0, %v469
        %v471 = vpop.f32.mrb[0].mxu0
        %472 = vmatprep.mubr.bf16.mxu0 0
        %473 = vmatmul.mubr.bf16.gmra.mrb[0].mxu0 %v343
        %v474 = vpop.f32.mrb[0].mxu0
        %v475 = vadd.f32 0.0, %v474
        %v476 = vpop.f32.mrb[0].mxu0
        %v477 = vpop.f32.mrb[0].mxu0
        %v478 = vadd.f32 0.0, %v477
        %v479 = vpop.f32.mrb[0].mxu0
        %480 = vmatprep.mubr.bf16.mxu0 0
        %481 = vmatmul.mubr.bf16.gmra.mrb[0].mxu0 %v346
        %v482 = vpop.f32.mrb[0].mxu0
        %v483 = vadd.f32 0.0, %v482
        %v484 = vpop.f32.mrb[0].mxu0
        %v485 = vpop.f32.mrb[0].mxu0
        %v486 = vadd.f32 0.0, %v485
        %v487 = vpop.f32.mrb[0].mxu0
        %488 = vdwg.mxu0
        %489 = vst [vmem:[%s172] sm:$0xff] %v387
        %490 = vst [vmem:[%s172 + $0x8] sm:$0xff] %v390
        %491 = vst [vmem:[%s172 + $0x10] sm:$0xff] %v395
        %492 = vst [vmem:[%s172 + $0x18] sm:$0xff] %v398
        %493 = vst [vmem:[%s172 + $0x20] sm:$0xff] %v403
        %494 = vst [vmem:[%s172 + $0x28] sm:$0xff] %v406
        %495 = vst [vmem:[%s172 + $0x30] sm:$0xff] %v411
        %496 = vst [vmem:[%s172 + $0x38] sm:$0xff] %v414
        %497 = vst [vmem:[%s172 + $0x40] sm:$0xff] %v419
        %498 = vst [vmem:[%s172 + $0x48] sm:$0xff] %v422
        %499 = vst [vmem:[%s172 + $0x50] sm:$0xff] %v427
        %500 = vst [vmem:[%s172 + $0x58] sm:$0xff] %v430
        %501 = vst [vmem:[%s172 + $0x60] sm:$0xff] %v435
        %502 = vst [vmem:[%s172 + $0x68] sm:$0xff] %v438
        %503 = vst [vmem:[%s172 + $0x70] sm:$0xff] %v443
        %504 = vst [vmem:[%s172 + $0x78] sm:$0xff] %v446
        %505 = vst [vmem:[%s172 + $0x80] sm:$0xff] %v451
        %506 = vst [vmem:[%s172 + $0x88] sm:$0xff] %v454
        %507 = vst [vmem:[%s172 + $0x90] sm:$0xff] %v459
        %508 = vst [vmem:[%s172 + $0x98] sm:$0xff] %v462
        %509 = vst [vmem:[%s172 + $0xa0] sm:$0xff] %v467
        %510 = vst [vmem:[%s172 + $0xa8] sm:$0xff] %v470
        %511 = vst [vmem:[%s172 + $0xb0] sm:$0xff] %v475
        %512 = vst [vmem:[%s172 + $0xb8] sm:$0xff] %v478
        %513 = vst [vmem:[%s172 + $0xc0] sm:$0xff] %v483
        %514 = vst [vmem:[%s172 + $0xc8] sm:$0xff] %v486
        %s515 = sand.u32 %s87, 1
        %s516 = sand.u32 %s87, 1
        %s517 = smul.addr %s516, 208
        %s518 = scalar_lea.vmem [#allocation2], %s517
        // Predicated region
        $region29: #{diff_quant_conv2d.1} parent=27 // pred_check
          %p519 = pneg %p97
        $region30: #{diff_quant_conv2d.1} parent=27 // pred_check_branch
          %521 = sbr.rel (%p519) target = $region32
        $region31: #{diff_quant_conv2d.1} parent=27 // pred_region
          %s522 = smul.u32 26, %s17
          %s523 = ssub.s32 49, %s522
          %p524 = scmp.lt.s32.totalorder %s523, 26
          %s525 = scalar_select %p524, %s523, 26
          %s526 = smul.u32 128, %s525
          %p527 = scmp.ne.s32.totalorder 0, %s526
          %s528 = sadd.s32 %s18, %s522
          %s529 = smul.addr %s528, 8
          %s530 = scalar_lea.vmem %s2, %s529
          // Predicated region
          $region33: #{diff_quant_conv2d.1} parent=31 // pred_check
            %p531 = pneg %p527
          $region34: #{diff_quant_conv2d.1} parent=31 // pred_check_branch
            %533 = sbr.rel (%p531) target = $region36
          $region35: #{diff_quant_conv2d.1} parent=31 // pred_region
            // Predicated region
            $region37: #{diff_quant_conv2d.1} parent=35 // pred_check
              _
            $region38: #{diff_quant_conv2d.1} parent=35 // pred_check_branch
              %535 = sbr.rel (0) target = $region40
            $region39: #{diff_quant_conv2d.1} parent=35 // pred_region
              // Predicated region
              $region59: #{diff_quant_conv2d.1} parent=39 // pred_check
                _
              $region60: #{diff_quant_conv2d.1} parent=39 // pred_check_branch
                %635 = sbr.rel (0) target = $region62
              $region61: #{diff_quant_conv2d.1} parent=39 // pred_region
                %s636 = sdiv.u32.pop %s525, 26
                %s637 = srem.u32.pop %s525, 26
                // While loop
                $region63: #{diff_quant_conv2d.1} parent=61 // loop_pre_header
                  _
                $region64: #{diff_quant_conv2d.1} parent=61 // loop_header
                  %s639 = sphi 0, %s641
                  %p640 = scmp.ge.s32.totalorder %s639, %s636
                  %s644 = sphi 0, %s701
                  %s645 = sphi %s518, %s704
                  %s646 = sphi %s530, %s705
                $region65: #{diff_quant_conv2d.1} parent=61 // loop_header_branch
                  %643 = sbr.rel (%p640) target = $region69
                $region66: #{diff_quant_conv2d.1} parent=61 // loop_body
                  %v647 = vld [vmem:[%s645] sm:$0xff]
                  %648 = vst [vmem:[%s646] sm:$0xff] %v647
                  %v649 = vld [vmem:[%s645 + $0x8] sm:$0xff]
                  %650 = vst [vmem:[%s646 + $0x8] sm:$0xff] %v649
                  %v651 = vld [vmem:[%s645 + $0x10] sm:$0xff]
                  %652 = vst [vmem:[%s646 + $0x10] sm:$0xff] %v651
                  %v653 = vld [vmem:[%s645 + $0x18] sm:$0xff]
                  %654 = vst [vmem:[%s646 + $0x18] sm:$0xff] %v653
                  %v655 = vld [vmem:[%s645 + $0x20] sm:$0xff]
                  %656 = vst [vmem:[%s646 + $0x20] sm:$0xff] %v655
                  %v657 = vld [vmem:[%s645 + $0x28] sm:$0xff]
                  %658 = vst [vmem:[%s646 + $0x28] sm:$0xff] %v657
                  %v659 = vld [vmem:[%s645 + $0x30] sm:$0xff]
                  %660 = vst [vmem:[%s646 + $0x30] sm:$0xff] %v659
                  %v661 = vld [vmem:[%s645 + $0x38] sm:$0xff]
                  %662 = vst [vmem:[%s646 + $0x38] sm:$0xff] %v661
                  %v663 = vld [vmem:[%s645 + $0x40] sm:$0xff]
                  %664 = vst [vmem:[%s646 + $0x40] sm:$0xff] %v663
                  %v665 = vld [vmem:[%s645 + $0x48] sm:$0xff]
                  %666 = vst [vmem:[%s646 + $0x48] sm:$0xff] %v665
                  %v667 = vld [vmem:[%s645 + $0x50] sm:$0xff]
                  %668 = vst [vmem:[%s646 + $0x50] sm:$0xff] %v667
                  %v669 = vld [vmem:[%s645 + $0x58] sm:$0xff]
                  %670 = vst [vmem:[%s646 + $0x58] sm:$0xff] %v669
                  %v671 = vld [vmem:[%s645 + $0x60] sm:$0xff]
                  %672 = vst [vmem:[%s646 + $0x60] sm:$0xff] %v671
                  %v673 = vld [vmem:[%s645 + $0x68] sm:$0xff]
                  %674 = vst [vmem:[%s646 + $0x68] sm:$0xff] %v673
                  %v675 = vld [vmem:[%s645 + $0x70] sm:$0xff]
                  %676 = vst [vmem:[%s646 + $0x70] sm:$0xff] %v675
                  %v677 = vld [vmem:[%s645 + $0x78] sm:$0xff]
                  %678 = vst [vmem:[%s646 + $0x78] sm:$0xff] %v677
                  %v679 = vld [vmem:[%s645 + $0x80] sm:$0xff]
                  %680 = vst [vmem:[%s646 + $0x80] sm:$0xff] %v679
                  %v681 = vld [vmem:[%s645 + $0x88] sm:$0xff]
                  %682 = vst [vmem:[%s646 + $0x88] sm:$0xff] %v681
                  %v683 = vld [vmem:[%s645 + $0x90] sm:$0xff]
                  %684 = vst [vmem:[%s646 + $0x90] sm:$0xff] %v683
                  %v685 = vld [vmem:[%s645 + $0x98] sm:$0xff]
                  %686 = vst [vmem:[%s646 + $0x98] sm:$0xff] %v685
                  %v687 = vld [vmem:[%s645 + $0xa0] sm:$0xff]
                  %688 = vst [vmem:[%s646 + $0xa0] sm:$0xff] %v687
                  %v689 = vld [vmem:[%s645 + $0xa8] sm:$0xff]
                  %690 = vst [vmem:[%s646 + $0xa8] sm:$0xff] %v689
                  %v691 = vld [vmem:[%s645 + $0xb0] sm:$0xff]
                  %692 = vst [vmem:[%s646 + $0xb0] sm:$0xff] %v691
                  %v693 = vld [vmem:[%s645 + $0xb8] sm:$0xff]
                  %694 = vst [vmem:[%s646 + $0xb8] sm:$0xff] %v693
                  %v695 = vld [vmem:[%s645 + $0xc0] sm:$0xff]
                  %696 = vst [vmem:[%s646 + $0xc0] sm:$0xff] %v695
                  %v697 = vld [vmem:[%s645 + $0xc8] sm:$0xff]
                  %698 = vst [vmem:[%s646 + $0xc8] sm:$0xff] %v697
                  %s699 = sadd.s32 1, %s644
                  %p700 = scmp.ge.s32.totalorder %s699, %s636
                  %s701 = scalar_select %p700, 0, %s699
                  %s702 = smul.u32 %s701, 208
                  %s703 = smul.u32 %s701, 208
                  %s704 = scalar_lea.vmem %s518, %s702 [#allocation2]
                  %s705 = scalar_lea.vmem %s530, %s703
                $region67: #{diff_quant_conv2d.1} parent=61 // loop_footer
                  %s641 = sadd.s32 %s639, 1
                $region68: #{diff_quant_conv2d.1} parent=61 // loop_footer_branch
                  %638 = sbr.rel target = $region64
                $region69: #{diff_quant_conv2d.1} parent=61 // loop_exit
                  _
                %s706 = sdiv.u32.pop %s525, 26
                %s707 = srem.u32.pop %s525, 26
                %s708 = smul.u32 %s706, 26
                %s709 = smul.u32 8, %s708
                %s710 = scalar_lea.vmem %s518, %s709 [#allocation2]
                %s711 = smul.u32 8, %s708
                %s712 = scalar_lea.vmem %s530, %s711
                // While loop
                $region70: #{diff_quant_conv2d.1} parent=61 // loop_pre_header
                  _
                $region71: #{diff_quant_conv2d.1} parent=61 // loop_header
                  %s714 = sphi 0, %s716
                  %p715 = scmp.ge.s32.totalorder %s714, %s707
                  %s719 = sphi 0, %s726
                  %s720 = sphi %s710, %s729
                  %s721 = sphi %s712, %s730
                $region72: #{diff_quant_conv2d.1} parent=61 // loop_header_branch
                  %718 = sbr.rel (%p715) target = $region76
                $region73: #{diff_quant_conv2d.1} parent=61 // loop_body
                  %v722 = vld [vmem:[%s720] sm:$0xff]
                  %723 = vst [vmem:[%s721] sm:$0xff] %v722
                  %s724 = sadd.s32 1, %s719
                  %p725 = scmp.ge.s32.totalorder %s724, %s707
                  %s726 = scalar_select %p725, 0, %s724
                  %s727 = smul.u32 %s726, 8
                  %s728 = smul.u32 %s726, 8
                  %s729 = scalar_lea.vmem %s710, %s727 [#allocation2]
                  %s730 = scalar_lea.vmem %s712, %s728
                $region74: #{diff_quant_conv2d.1} parent=61 // loop_footer
                  %s716 = sadd.s32 %s714, 1
                $region75: #{diff_quant_conv2d.1} parent=61 // loop_footer_branch
                  %713 = sbr.rel target = $region71
                $region76: #{diff_quant_conv2d.1} parent=61 // loop_exit
                  _
              $region62: #{diff_quant_conv2d.1} parent=39 // pred_fallthru
                _
              // Predicated region
              $region77: #{diff_quant_conv2d.1} parent=39 // pred_check
                _
              $region78: #{diff_quant_conv2d.1} parent=39 // pred_check_branch
                %732 = sbr.rel target = $region80
              $region79: #{diff_quant_conv2d.1} parent=39 // pred_region
                _
              $region80: #{diff_quant_conv2d.1} parent=39 // pred_fallthru
                _
            $region40: #{diff_quant_conv2d.1} parent=35 // pred_fallthru
              _
            // Predicated region
            $region41: #{diff_quant_conv2d.1} parent=35 // pred_check
              _
            $region42: #{diff_quant_conv2d.1} parent=35 // pred_check_branch
              %537 = sbr.rel target = $region44
            $region43: #{diff_quant_conv2d.1} parent=35 // pred_region
              %s539 = sdiv.u32.pop %s525, 26
              %s540 = srem.u32.pop %s525, 26
              // While loop
              $region45: #{diff_quant_conv2d.1} parent=43 // loop_pre_header
                _
              $region46: #{diff_quant_conv2d.1} parent=43 // loop_header
                %s542 = sphi 0, %s544
                %p543 = scmp.ge.s32.totalorder %s542, %s539
                %s547 = sphi 0, %s604
                %s548 = sphi %s518, %s607
                %s549 = sphi %s530, %s608
              $region47: #{diff_quant_conv2d.1} parent=43 // loop_header_branch
                %546 = sbr.rel (%p543) target = $region51
              $region48: #{diff_quant_conv2d.1} parent=43 // loop_body
                %v550 = vld [vmem:[%s548] sm:$0xff]
                %551 = vst [vmem:[%s549] sm:$0xff] %v550
                %v552 = vld [vmem:[%s548 + $0x8] sm:$0xff]
                %553 = vst [vmem:[%s549 + $0x8] sm:$0xff] %v552
                %v554 = vld [vmem:[%s548 + $0x10] sm:$0xff]
                %555 = vst [vmem:[%s549 + $0x10] sm:$0xff] %v554
                %v556 = vld [vmem:[%s548 + $0x18] sm:$0xff]
                %557 = vst [vmem:[%s549 + $0x18] sm:$0xff] %v556
                %v558 = vld [vmem:[%s548 + $0x20] sm:$0xff]
                %559 = vst [vmem:[%s549 + $0x20] sm:$0xff] %v558
                %v560 = vld [vmem:[%s548 + $0x28] sm:$0xff]
                %561 = vst [vmem:[%s549 + $0x28] sm:$0xff] %v560
                %v562 = vld [vmem:[%s548 + $0x30] sm:$0xff]
                %563 = vst [vmem:[%s549 + $0x30] sm:$0xff] %v562
                %v564 = vld [vmem:[%s548 + $0x38] sm:$0xff]
                %565 = vst [vmem:[%s549 + $0x38] sm:$0xff] %v564
                %v566 = vld [vmem:[%s548 + $0x40] sm:$0xff]
                %567 = vst [vmem:[%s549 + $0x40] sm:$0xff] %v566
                %v568 = vld [vmem:[%s548 + $0x48] sm:$0xff]
                %569 = vst [vmem:[%s549 + $0x48] sm:$0xff] %v568
                %v570 = vld [vmem:[%s548 + $0x50] sm:$0xff]
                %571 = vst [vmem:[%s549 + $0x50] sm:$0xff] %v570
                %v572 = vld [vmem:[%s548 + $0x58] sm:$0xff]
                %573 = vst [vmem:[%s549 + $0x58] sm:$0xff] %v572
                %v574 = vld [vmem:[%s548 + $0x60] sm:$0xff]
                %575 = vst [vmem:[%s549 + $0x60] sm:$0xff] %v574
                %v576 = vld [vmem:[%s548 + $0x68] sm:$0xff]
                %577 = vst [vmem:[%s549 + $0x68] sm:$0xff] %v576
                %v578 = vld [vmem:[%s548 + $0x70] sm:$0xff]
                %579 = vst [vmem:[%s549 + $0x70] sm:$0xff] %v578
                %v580 = vld [vmem:[%s548 + $0x78] sm:$0xff]
                %581 = vst [vmem:[%s549 + $0x78] sm:$0xff] %v580
                %v582 = vld [vmem:[%s548 + $0x80] sm:$0xff]
                %583 = vst [vmem:[%s549 + $0x80] sm:$0xff] %v582
                %v584 = vld [vmem:[%s548 + $0x88] sm:$0xff]
                %585 = vst [vmem:[%s549 + $0x88] sm:$0xff] %v584
                %v586 = vld [vmem:[%s548 + $0x90] sm:$0xff]
                %587 = vst [vmem:[%s549 + $0x90] sm:$0xff] %v586
                %v588 = vld [vmem:[%s548 + $0x98] sm:$0xff]
                %589 = vst [vmem:[%s549 + $0x98] sm:$0xff] %v588
                %v590 = vld [vmem:[%s548 + $0xa0] sm:$0xff]
                %591 = vst [vmem:[%s549 + $0xa0] sm:$0xff] %v590
                %v592 = vld [vmem:[%s548 + $0xa8] sm:$0xff]
                %593 = vst [vmem:[%s549 + $0xa8] sm:$0xff] %v592
                %v594 = vld [vmem:[%s548 + $0xb0] sm:$0xff]
                %595 = vst [vmem:[%s549 + $0xb0] sm:$0xff] %v594
                %v596 = vld [vmem:[%s548 + $0xb8] sm:$0xff]
                %597 = vst [vmem:[%s549 + $0xb8] sm:$0xff] %v596
                %v598 = vld [vmem:[%s548 + $0xc0] sm:$0xff]
                %599 = vst [vmem:[%s549 + $0xc0] sm:$0xff] %v598
                %v600 = vld [vmem:[%s548 + $0xc8] sm:$0xff]
                %601 = vst [vmem:[%s549 + $0xc8] sm:$0xff] %v600
                %s602 = sadd.s32 1, %s547
                %p603 = scmp.ge.s32.totalorder %s602, %s539
                %s604 = scalar_select %p603, 0, %s602
                %s605 = smul.u32 %s604, 208
                %s606 = smul.u32 %s604, 208
                %s607 = scalar_lea.vmem %s518, %s605 [#allocation2]
                %s608 = scalar_lea.vmem %s530, %s606
              $region49: #{diff_quant_conv2d.1} parent=43 // loop_footer
                %s544 = sadd.s32 %s542, 1
              $region50: #{diff_quant_conv2d.1} parent=43 // loop_footer_branch
                %541 = sbr.rel target = $region46
              $region51: #{diff_quant_conv2d.1} parent=43 // loop_exit
                _
              %s609 = sdiv.u32.pop %s525, 26
              %s610 = srem.u32.pop %s525, 26
              %s611 = smul.u32 %s609, 26
              %s612 = smul.u32 8, %s611
              %s613 = scalar_lea.vmem %s518, %s612 [#allocation2]
              %s614 = smul.u32 8, %s611
              %s615 = scalar_lea.vmem %s530, %s614
              // While loop
              $region52: #{diff_quant_conv2d.1} parent=43 // loop_pre_header
                _
              $region53: #{diff_quant_conv2d.1} parent=43 // loop_header
                %s617 = sphi 0, %s619
                %p618 = scmp.ge.s32.totalorder %s617, %s610
                %s622 = sphi 0, %s629
                %s623 = sphi %s613, %s632
                %s624 = sphi %s615, %s633
              $region54: #{diff_quant_conv2d.1} parent=43 // loop_header_branch
                %621 = sbr.rel (%p618) target = $region58
              $region55: #{diff_quant_conv2d.1} parent=43 // loop_body
                %v625 = vld [vmem:[%s623] sm:$0xff]
                %626 = vst [vmem:[%s624] sm:$0xff] %v625
                %s627 = sadd.s32 1, %s622
                %p628 = scmp.ge.s32.totalorder %s627, %s610
                %s629 = scalar_select %p628, 0, %s627
                %s630 = smul.u32 %s629, 8
                %s631 = smul.u32 %s629, 8
                %s632 = scalar_lea.vmem %s613, %s630 [#allocation2]
                %s633 = scalar_lea.vmem %s615, %s631
              $region56: #{diff_quant_conv2d.1} parent=43 // loop_footer
                %s619 = sadd.s32 %s617, 1
              $region57: #{diff_quant_conv2d.1} parent=43 // loop_footer_branch
                %616 = sbr.rel target = $region53
              $region58: #{diff_quant_conv2d.1} parent=43 // loop_exit
                _
            $region44: #{diff_quant_conv2d.1} parent=35 // pred_fallthru
              _
          $region36: #{diff_quant_conv2d.1} parent=31 // pred_fallthru
            _
          %733 = vnop
        $region32: #{diff_quant_conv2d.1} parent=27 // pred_fallthru
          _
      $region28: #{diff_quant_conv2d.1} parent=5 // pred_fallthru
        _
      %p734 = scmp.le.s32.totalorder 2, %s8
      // Predicated region
      $region81: #{diff_quant_conv2d.1} parent=5 // pred_check
        %p735 = pneg %p734
      $region82: #{diff_quant_conv2d.1} parent=5 // pred_check_branch
        %737 = sbr.rel (%p735) target = $region84
      $region83: #{diff_quant_conv2d.1} parent=5 // pred_region
        %s738 = ssub.s32 %s8, 2
        // Predicated region
        $region85: #{diff_quant_conv2d.1} parent=83 // pred_check
          %p739 = pneg %p103
        $region86: #{diff_quant_conv2d.1} parent=83 // pred_check_branch
          %741 = sbr.rel (%p739) target = $region88
        $region87: #{diff_quant_conv2d.1} parent=83 // pred_region
          %s742 = sand.u32 %s88, 1
          %s743 = sand.u32 %s88, 1
          %s744 = smul.addr %s743, 208
          %s745 = scalar_lea.vmem [#allocation2], %s744
        $region88: #{diff_quant_conv2d.1} parent=83 // pred_fallthru
          _
      $region84: #{diff_quant_conv2d.1} parent=5 // pred_fallthru
        _
    $region6: #{diff_quant_conv2d.1} parent=1 // loop_footer
      %s12 = sadd.s32 1, %s8
    $region7: #{diff_quant_conv2d.1} parent=1 // loop_footer_branch
      %7 = sbr.rel target = $region3
    $region8: #{diff_quant_conv2d.1} parent=1 // loop_exit
      _

</llo_original>
